<compile_context>
chip_gen: v5e
topology: v5e:2x2
jax: 0.10.0
libtpu: 0.0.40
codegen_flags: <defaults>
</compile_context>

<pallas_src>
import jax
import jax.numpy as jnp
from jax.experimental import pallas as pl
from jax.experimental.pallas import tpu as pltpu

BN_EPS = 1e-5


def _padded_bytes(shape, itemsize=4):
    """Bytes of a buffer after (8, 128) tile padding of the minor two dims."""
    shape = tuple(shape)
    if len(shape) == 1:
        shape = (1,) + shape
    lead = 1
    for d in shape[:-2]:
        lead *= d
    sub = -(-shape[-2] // 8) * 8
    lane = -(-shape[-1] // 128) * 128
    return lead * sub * lane * itemsize


def conv_block_forward(x_nchw, params):
    """ConvBlock.forward equivalent. Input/output are NCHW like PyTorch."""
    N, Cin, H, W = x_nchw.shape
    Cout = params["w1"].shape[-1]
    Hp = H + 2                      # rows per image incl. top/bottom zero pad
    WCin, WCout = W * Cin, W * Cout
    R = N * Hp                      # total padded rows
    Rm = R - 2                      # rows produced by each conv pass

    # ---------------- wrapper-side (tiny, one-time per call) -----------------
    # NCHW -> NHWC -> lane-dense (N*H, W*Cin); contiguous reshape.
    x2d = jnp.transpose(x_nchw, (0, 2, 3, 1)).astype(jnp.float32).reshape(N * H, WCin)

    # Banded conv weights: wb[kh, q*Cin+c, j*Cout+co] = w[kh, kw, c, co] where
    # q = j + kw - 1 (taps falling outside the row are omitted = zero padding).
    q_idx = jnp.arange(W)[None, :, None]
    j_idx = jnp.arange(W)[None, None, :]
    kw_idx = jnp.arange(3)[:, None, None]
    sel = (q_idx == j_idx + kw_idx - 1).astype(jnp.float32)          # (3, W, W)
    w1 = params["w1"].astype(jnp.float32)                            # (3,3,Cin,Cout)
    w2 = params["w2"].astype(jnp.float32)                            # (3,3,Cout,Cout)
    wb1 = jnp.einsum("kqj,hkco->hqcjo", sel, w1).reshape(3, WCin, WCout)
    wb2 = jnp.einsum("kqj,hkco->hqcjo", sel, w2).reshape(3, WCout, WCout)

    # Channel-group averaging matrix: (y_lane_sums @ m_avg) = per-channel mean
    # replicated into every lane of its group.  Also pre-tile BN affine params.
    p = jnp.tile(jnp.eye(Cout, dtype=jnp.float32), (W, 1))           # (WCout, Cout)
    m_avg = (p @ p.T) / float(N * H * W)                             # (WCout, WCout)
    g1t = jnp.tile(params["gamma1"].reshape(1, Cout), (1, W))        # (1, WCout)
    b1t = jnp.tile(params["beta1"].reshape(1, Cout), (1, W))
    g2t = jnp.tile(params["gamma2"].reshape(1, Cout), (1, W))
    b2t = jnp.tile(params["beta2"].reshape(1, Cout), (1, W))

    # ------------------------------ kernel -----------------------------------
    def kernel(x_ref, wb1_ref, wb2_ref, m_ref, g1t_ref, b1t_ref, g2t_ref, b2t_ref,
               out_ref, xpad_ref, y1pad_ref):
        # Build the row-padded stage-1 input in VMEM (W padding is handled by
        # the band structure, so only H pad rows exist physically).
        xpad_ref[...] = jnp.zeros_like(xpad_ref)      # ~5 vreg stores, trivial
        for n in range(N):
            xpad_ref[n * Hp + 1:n * Hp + 1 + H, :] = x_ref[n * H:(n + 1) * H, :]

        # Rows of the Rm computed rows that are real outputs (not pad / seams).
        row = jax.lax.broadcasted_iota(jnp.int32, (Rm, 1), 0)
        valid = ((row % Hp) < H).astype(jnp.float32)                 # (Rm, 1)

        m_avg_v = m_ref[...]

        def conv_bn_relu(pad_ref, wb_ref, gt, bt):
            # 3x3 conv = 3 banded matmuls over kh-shifted sublane slices.
            acc = jnp.zeros((Rm, WCout), jnp.float32)
            for kh in range(3):
                acc = acc + jnp.dot(pad_ref[kh:kh + Rm, :], wb_ref[kh],
                                    preferred_element_type=jnp.float32)
            # BatchNorm2d training-mode forward: biased batch stats over (N,H,W),
            # computed in lane-dense space via the channel-averaging matmul.
            mean_t = jnp.dot(jnp.sum(acc * valid, axis=0, keepdims=True), m_avg_v,
                             preferred_element_type=jnp.float32)     # (1, WCout)
            d = acc - mean_t
            var_t = jnp.dot(jnp.sum(d * d * valid, axis=0, keepdims=True), m_avg_v,
                            preferred_element_type=jnp.float32)      # (1, WCout)
            scale_t = gt * jax.lax.rsqrt(var_t + BN_EPS)
            return jnp.maximum(d * scale_t + bt, 0.0)                # conv->BN->ReLU

        # -------- stage 1 --------
        y1 = conv_bn_relu(xpad_ref, wb1_ref, g1t_ref[...], b1t_ref[...])

        # Stage-1 activations never leave VMEM: one full-width, lane-aligned,
        # row-shifted masked store builds the padded stage-2 input (masked seam
        # rows land exactly on the inter-image pad rows -> zero).
        zero_row = jnp.zeros((1, WCout), jnp.float32)
        y1pad_ref[0:1, :] = zero_row
        y1pad_ref[R - 1:R, :] = zero_row
        y1pad_ref[1:1 + Rm, :] = y1 * valid

        # -------- stage 2 --------
        y2 = conv_bn_relu(y1pad_ref, wb2_ref, g2t_ref[...], b2t_ref[...])

        # Lane-dense (N*H, W*Cout) output: drop the per-image pad/seam rows.
        for n in range(N):
            out_ref[n * H:(n + 1) * H, :] = y2[n * Hp:n * Hp + H, :]

    # ----------------------------- pallas_call -------------------------------
    io_shapes = [x2d.shape, wb1.shape, wb2.shape, m_avg.shape,
                 g1t.shape, b1t.shape, g2t.shape, b2t.shape, (N * H, WCout)]
    scratch_shapes_ = [(R, WCin), (R, WCout)]
    vmem_limit = int(2 * sum(_padded_bytes(s) for s in io_shapes)
                     + sum(_padded_bytes(s) for s in scratch_shapes_)
                     + (8 << 20))   # derived from actual buffers + headroom

    grid_spec = pltpu.PrefetchScalarGridSpec(
        num_scalar_prefetch=0,
        grid=(1,),                                   # single fused invocation
        in_specs=[
            pl.BlockSpec((N * H, WCin), lambda i: (0, 0)),
            pl.BlockSpec((3, WCin, WCout), lambda i: (0, 0, 0)),
            pl.BlockSpec((3, WCout, WCout), lambda i: (0, 0, 0)),
            pl.BlockSpec((WCout, WCout), lambda i: (0, 0)),
            pl.BlockSpec((1, WCout), lambda i: (0, 0)),
            pl.BlockSpec((1, WCout), lambda i: (0, 0)),
            pl.BlockSpec((1, WCout), lambda i: (0, 0)),
            pl.BlockSpec((1, WCout), lambda i: (0, 0)),
        ],
        out_specs=pl.BlockSpec((N * H, WCout), lambda i: (0, 0)),
        scratch_shapes=[
            pltpu.VMEM((R, WCin), jnp.float32),      # row-padded stage-1 input
            pltpu.VMEM((R, WCout), jnp.float32),     # row-padded stage-1 activations
        ],
    )

    out2d = pl.pallas_call(
        kernel,
        out_shape=jax.ShapeDtypeStruct((N * H, WCout), jnp.float32),
        grid_spec=grid_spec,
        compiler_params=pltpu.CompilerParams(
            dimension_semantics=("arbitrary",),
            vmem_limit_bytes=vmem_limit,
        ),
    )(x2d, wb1, wb2, m_avg, g1t, b1t, g2t, b2t)

    # (N*H, W*Cout) -> NHWC -> NCHW (contiguous reshape + one transpose).
    out_nhwc = out2d.reshape(N, H, W, Cout)
    return jnp.transpose(out_nhwc, (0, 3, 1, 2))


def init_params(key, in_channels, out_channels):
    k1, k2 = jax.random.split(key)
    # Conv weights stored in HWIO (kh, kw, Cin, Cout); conv bias=False.
    w1 = 0.1 * jax.random.normal(k1, (3, 3, in_channels, out_channels), jnp.float32)
    w2 = 0.1 * jax.random.normal(k2, (3, 3, out_channels, out_channels), jnp.float32)
    return {
        "w1": w1,
        "w2": w2,
        # nn.BatchNorm2d defaults: weight=1, bias=0.
        "gamma1": jnp.ones((out_channels,), jnp.float32),
        "beta1": jnp.zeros((out_channels,), jnp.float32),
        "gamma2": jnp.ones((out_channels,), jnp.float32),
        "beta2": jnp.zeros((out_channels,), jnp.float32),
    }


if __name__ == "__main__":
    key = jax.random.PRNGKey(0)
    k_x, k_p = jax.random.split(key)

    N, Cin, Cout, H, W = 2, 4, 8, 16, 16
    x = jax.random.normal(k_x, (N, Cin, H, W), jnp.float32)  # NCHW like PyTorch
    params = init_params(k_p, Cin, Cout)

    out = jax.jit(conv_block_forward)(x, params)
    jax.block_until_ready(out)
    assert out.shape == (N, Cout, H, W), out.shape
    print("KERNEL_OK")
</pallas_src>

<mosaic_0001>
module attributes {stable_mosaic.version = 11 : i64} {
  func.func @kernel(%arg0: i32, %arg1: memref<32x64xf32, #tpu.memory_space<vmem>>, %arg2: memref<3x64x128xf32, #tpu.memory_space<vmem>>, %arg3: memref<3x128x128xf32, #tpu.memory_space<vmem>>, %arg4: memref<128x128xf32, #tpu.memory_space<vmem>>, %arg5: memref<1x128xf32, #tpu.memory_space<vmem>>, %arg6: memref<1x128xf32, #tpu.memory_space<vmem>>, %arg7: memref<1x128xf32, #tpu.memory_space<vmem>>, %arg8: memref<1x128xf32, #tpu.memory_space<vmem>>, %arg9: memref<32x128xf32, #tpu.memory_space<vmem>>, %arg10: memref<36x64xf32, #tpu.memory_space<vmem>>, %arg11: memref<36x128xf32, #tpu.memory_space<vmem>>) attributes {dimension_semantics = [#tpu.dimension_semantics<arbitrary>], iteration_bounds = array<i64: 1>, scalar_prefetch = 0 : i64, scratch_operands = 2 : i64, tpu.core_type = #tpu.core_type<tc>, window_params = [{pipeline_mode = #tpu.pipeline_mode<synchronous>, transform_indices = @transform_0, window_bounds = array<i64: 32, 64>}, {pipeline_mode = #tpu.pipeline_mode<synchronous>, transform_indices = @transform_1, window_bounds = array<i64: 3, 64, 128>}, {pipeline_mode = #tpu.pipeline_mode<synchronous>, transform_indices = @transform_2, window_bounds = array<i64: 3, 128, 128>}, {pipeline_mode = #tpu.pipeline_mode<synchronous>, transform_indices = @transform_3, window_bounds = array<i64: 128, 128>}, {pipeline_mode = #tpu.pipeline_mode<synchronous>, transform_indices = @transform_4, window_bounds = array<i64: 1, 128>}, {pipeline_mode = #tpu.pipeline_mode<synchronous>, transform_indices = @transform_5, window_bounds = array<i64: 1, 128>}, {pipeline_mode = #tpu.pipeline_mode<synchronous>, transform_indices = @transform_6, window_bounds = array<i64: 1, 128>}, {pipeline_mode = #tpu.pipeline_mode<synchronous>, transform_indices = @transform_7, window_bounds = array<i64: 1, 128>}, {pipeline_mode = #tpu.pipeline_mode<synchronous>, transform_indices = @transform_8, window_bounds = array<i64: 32, 128>}]} {
    %cst = arith.constant 0.000000e+00 : f32
    %0 = vector.broadcast %cst : f32 to vector<36x64xf32>
    %c0 = arith.constant 0 : index
    %c0_0 = arith.constant 0 : index
    %1 = vector.load %arg10[%c0, %c0_0] : memref<36x64xf32, #tpu.memory_space<vmem>>, vector<36x64xf32>
    tpu.vector_store %arg10[%c0, %c0_0], %0 {strides = array<i32>} : memref<36x64xf32, #tpu.memory_space<vmem>>, vector<36x64xf32>,
    %c0_1 = arith.constant 0 : index
    %c0_2 = arith.constant 0 : index
    %2 = vector.load %arg1[%c0_1, %c0_2] : memref<32x64xf32, #tpu.memory_space<vmem>>, vector<16x64xf32>
    %c1 = arith.constant 1 : index
    %c0_3 = arith.constant 0 : index
    %3 = vector.load %arg10[%c1, %c0_3] : memref<36x64xf32, #tpu.memory_space<vmem>>, vector<16x64xf32>
    tpu.vector_store %arg10[%c1, %c0_3], %2 {strides = array<i32>} : memref<36x64xf32, #tpu.memory_space<vmem>>, vector<16x64xf32>,
    %c16 = arith.constant 16 : index
    %c0_4 = arith.constant 0 : index
    %4 = vector.load %arg1[%c16, %c0_4] : memref<32x64xf32, #tpu.memory_space<vmem>>, vector<16x64xf32>
    %c19 = arith.constant 19 : index
    %c0_5 = arith.constant 0 : index
    %5 = vector.load %arg10[%c19, %c0_5] : memref<36x64xf32, #tpu.memory_space<vmem>>, vector<16x64xf32>
    tpu.vector_store %arg10[%c19, %c0_5], %4 {strides = array<i32>} : memref<36x64xf32, #tpu.memory_space<vmem>>, vector<16x64xf32>,
    %6 = tpu.iota {dimensions = array<i32: 0>} : vector<34x1xi32>
    %c18_i32 = arith.constant 18 : i32
    %c0_i32 = arith.constant 0 : i32
    %7 = arith.cmpi eq, %c18_i32, %c0_i32 : i32
    %c1_i32 = arith.constant 1 : i32
    %8 = arith.select %7, %c1_i32, %c18_i32 : i32
    %9 = vector.broadcast %8 : i32 to vector<34x1xi32>
    %10 = arith.remsi %6, %9 : vector<34x1xi32>
    %c0_i32_6 = arith.constant 0 : i32
    %11 = vector.broadcast %c0_i32_6 : i32 to vector<34x1xi32>
    %12 = arith.cmpi ne, %10, %11 : vector<34x1xi32>
    %c0_i32_7 = arith.constant 0 : i32
    %13 = vector.broadcast %c0_i32_7 : i32 to vector<34x1xi32>
    %14 = arith.cmpi slt, %10, %13 : vector<34x1xi32>
    %c0_i32_8 = arith.constant 0 : i32
    %15 = arith.cmpi slt, %8, %c0_i32_8 : i32
    %16 = vector.broadcast %15 : i1 to vector<34x1xi1>
    %17 = vector.broadcast %16 : vector<34x1xi1> to vector<34x1xi1>
    %18 = arith.xori %14, %17 : vector<34x1xi1>
    %19 = arith.andi %18, %12 : vector<34x1xi1>
    %20 = vector.broadcast %8 : i32 to vector<34x1xi32>
    %21 = arith.addi %10, %20 : vector<34x1xi32>
    %22 = arith.select %19, %21, %10 : vector<34x1xi1>, vector<34x1xi32>
    %c16_i32 = arith.constant 16 : i32
    %23 = vector.broadcast %c16_i32 : i32 to vector<34x1xi32>
    %24 = arith.cmpi slt, %22, %23 : vector<34x1xi32>
    %25 = arith.extui %24 : vector<34x1xi1> to vector<34x1xi32>
    %26 = arith.sitofp %25 : vector<34x1xi32> to vector<34x1xf32>
    %c0_9 = arith.constant 0 : index
    %c0_10 = arith.constant 0 : index
    %27 = vector.load %arg4[%c0_9, %c0_10] : memref<128x128xf32, #tpu.memory_space<vmem>>, vector<128x128xf32>
    %c0_11 = arith.constant 0 : index
    %c0_12 = arith.constant 0 : index
    %28 = vector.load %arg5[%c0_11, %c0_12] : memref<1x128xf32, #tpu.memory_space<vmem>>, vector<1x128xf32>
    %c0_13 = arith.constant 0 : index
    %c0_14 = arith.constant 0 : index
    %29 = vector.load %arg6[%c0_13, %c0_14] : memref<1x128xf32, #tpu.memory_space<vmem>>, vector<1x128xf32>
    %cst_15 = arith.constant 0.000000e+00 : f32
    %30 = vector.broadcast %cst_15 : f32 to vector<34x128xf32>
    %c0_16 = arith.constant 0 : index
    %c0_17 = arith.constant 0 : index
    %31 = vector.load %arg10[%c0_16, %c0_17] : memref<36x64xf32, #tpu.memory_space<vmem>>, vector<34x64xf32>
    %c0_18 = arith.constant 0 : index
    %c0_19 = arith.constant 0 : index
    %c0_20 = arith.constant 0 : index
    %32 = vector.load %arg2[%c0_18, %c0_19, %c0_20] : memref<3x64x128xf32, #tpu.memory_space<vmem>>, vector<1x64x128xf32>
    %33 = vector.shape_cast %32 : vector<1x64x128xf32> to vector<64x128xf32>
    %cst_21 = arith.constant dense<0.000000e+00> : vector<34x128xf32>
    %34 = tpu.matmul %31, %33, %cst_21 {dimension_numbers = #tpu.dot_dimension_numbers<[1], [0], [0], [1], [0, 0, 1, 1], [], []>} : vector<34x64xf32>, vector<64x128xf32>, vector<34x128xf32> -> vector<34x128xf32>
    %35 = arith.addf %30, %34 : vector<34x128xf32>
    %c1_22 = arith.constant 1 : index
    %c0_23 = arith.constant 0 : index
    %36 = vector.load %arg10[%c1_22, %c0_23] : memref<36x64xf32, #tpu.memory_space<vmem>>, vector<34x64xf32>
    %c1_24 = arith.constant 1 : index
    %c0_25 = arith.constant 0 : index
    %c0_26 = arith.constant 0 : index
    %37 = vector.load %arg2[%c1_24, %c0_25, %c0_26] : memref<3x64x128xf32, #tpu.memory_space<vmem>>, vector<1x64x128xf32>
    %38 = vector.shape_cast %37 : vector<1x64x128xf32> to vector<64x128xf32>
    %cst_27 = arith.constant dense<0.000000e+00> : vector<34x128xf32>
    %39 = tpu.matmul %36, %38, %cst_27 {dimension_numbers = #tpu.dot_dimension_numbers<[1], [0], [0], [1], [0, 0, 1, 1], [], []>} : vector<34x64xf32>, vector<64x128xf32>, vector<34x128xf32> -> vector<34x128xf32>
    %40 = arith.addf %35, %39 : vector<34x128xf32>
    %c2 = arith.constant 2 : index
    %c0_28 = arith.constant 0 : index
    %41 = vector.load %arg10[%c2, %c0_28] : memref<36x64xf32, #tpu.memory_space<vmem>>, vector<34x64xf32>
    %c2_29 = arith.constant 2 : index
    %c0_30 = arith.constant 0 : index
    %c0_31 = arith.constant 0 : index
    %42 = vector.load %arg2[%c2_29, %c0_30, %c0_31] : memref<3x64x128xf32, #tpu.memory_space<vmem>>, vector<1x64x128xf32>
    %43 = vector.shape_cast %42 : vector<1x64x128xf32> to vector<64x128xf32>
    %cst_32 = arith.constant dense<0.000000e+00> : vector<34x128xf32>
    %44 = tpu.matmul %41, %43, %cst_32 {dimension_numbers = #tpu.dot_dimension_numbers<[1], [0], [0], [1], [0, 0, 1, 1], [], []>} : vector<34x64xf32>, vector<64x128xf32>, vector<34x128xf32> -> vector<34x128xf32>
    %45 = arith.addf %40, %44 : vector<34x128xf32>
    %46 = vector.broadcast %26 : vector<34x1xf32> to vector<34x128xf32>
    %47 = arith.mulf %45, %46 : vector<34x128xf32>
    %cst_33 = arith.constant dense<0.000000e+00> : vector<128xf32>
    %48 = vector.multi_reduction <add>, %47, %cst_33 [0] : vector<34x128xf32> to vector<128xf32>
    %49 = vector.shape_cast %48 : vector<128xf32> to vector<1x128xf32>
    %cst_34 = arith.constant dense<0.000000e+00> : vector<1x128xf32>
    %50 = tpu.matmul %49, %27, %cst_34 {dimension_numbers = #tpu.dot_dimension_numbers<[1], [0], [0], [1], [0, 0, 1, 1], [], []>} : vector<1x128xf32>, vector<128x128xf32>, vector<1x128xf32> -> vector<1x128xf32>
    %51 = vector.broadcast %50 : vector<1x128xf32> to vector<34x128xf32>
    %52 = arith.subf %45, %51 : vector<34x128xf32>
    %53 = arith.mulf %52, %52 : vector<34x128xf32>
    %54 = vector.broadcast %26 : vector<34x1xf32> to vector<34x128xf32>
    %55 = arith.mulf %53, %54 : vector<34x128xf32>
    %cst_35 = arith.constant dense<0.000000e+00> : vector<128xf32>
    %56 = vector.multi_reduction <add>, %55, %cst_35 [0] : vector<34x128xf32> to vector<128xf32>
    %57 = vector.shape_cast %56 : vector<128xf32> to vector<1x128xf32>
    %cst_36 = arith.constant dense<0.000000e+00> : vector<1x128xf32>
    %58 = tpu.matmul %57, %27, %cst_36 {dimension_numbers = #tpu.dot_dimension_numbers<[1], [0], [0], [1], [0, 0, 1, 1], [], []>} : vector<1x128xf32>, vector<128x128xf32>, vector<1x128xf32> -> vector<1x128xf32>
    %cst_37 = arith.constant 9.99999974E-6 : f32
    %59 = vector.broadcast %cst_37 : f32 to vector<1x128xf32>
    %60 = arith.addf %58, %59 : vector<1x128xf32>
    %61 = math.rsqrt %60 : vector<1x128xf32>
    %62 = arith.mulf %28, %61 : vector<1x128xf32>
    %63 = vector.broadcast %62 : vector<1x128xf32> to vector<34x128xf32>
    %64 = arith.mulf %52, %63 : vector<34x128xf32>
    %65 = vector.broadcast %29 : vector<1x128xf32> to vector<34x128xf32>
    %66 = arith.addf %64, %65 : vector<34x128xf32>
    %cst_38 = arith.constant 0.000000e+00 : f32
    %67 = vector.broadcast %cst_38 : f32 to vector<34x128xf32>
    %68 = arith.maximumf %66, %67 : vector<34x128xf32>
    %cst_39 = arith.constant 0.000000e+00 : f32
    %69 = vector.broadcast %cst_39 : f32 to vector<1x128xf32>
    %c0_40 = arith.constant 0 : index
    %c0_41 = arith.constant 0 : index
    %70 = vector.load %arg11[%c0_40, %c0_41] : memref<36x128xf32, #tpu.memory_space<vmem>>, vector<1x128xf32>
    tpu.vector_store %arg11[%c0_40, %c0_41], %69 {strides = array<i32>} : memref<36x128xf32, #tpu.memory_space<vmem>>, vector<1x128xf32>,
    %c35 = arith.constant 35 : index
    %c0_42 = arith.constant 0 : index
    %71 = vector.load %arg11[%c35, %c0_42] : memref<36x128xf32, #tpu.memory_space<vmem>>, vector<1x128xf32>
    tpu.vector_store %arg11[%c35, %c0_42], %69 {strides = array<i32>} : memref<36x128xf32, #tpu.memory_space<vmem>>, vector<1x128xf32>,
    %72 = vector.broadcast %26 : vector<34x1xf32> to vector<34x128xf32>
    %73 = arith.mulf %68, %72 : vector<34x128xf32>
    %c1_43 = arith.constant 1 : index
    %c0_44 = arith.constant 0 : index
    %74 = vector.load %arg11[%c1_43, %c0_44] : memref<36x128xf32, #tpu.memory_space<vmem>>, vector<34x128xf32>
    tpu.vector_store %arg11[%c1_43, %c0_44], %73 {strides = array<i32>} : memref<36x128xf32, #tpu.memory_space<vmem>>, vector<34x128xf32>,
    %c0_45 = arith.constant 0 : index
    %c0_46 = arith.constant 0 : index
    %75 = vector.load %arg7[%c0_45, %c0_46] : memref<1x128xf32, #tpu.memory_space<vmem>>, vector<1x128xf32>
    %c0_47 = arith.constant 0 : index
    %c0_48 = arith.constant 0 : index
    %76 = vector.load %arg8[%c0_47, %c0_48] : memref<1x128xf32, #tpu.memory_space<vmem>>, vector<1x128xf32>
    %cst_49 = arith.constant 0.000000e+00 : f32
    %77 = vector.broadcast %cst_49 : f32 to vector<34x128xf32>
    %c0_50 = arith.constant 0 : index
    %c0_51 = arith.constant 0 : index
    %78 = vector.load %arg11[%c0_50, %c0_51] : memref<36x128xf32, #tpu.memory_space<vmem>>, vector<34x128xf32>
    %c0_52 = arith.constant 0 : index
    %c0_53 = arith.constant 0 : index
    %c0_54 = arith.constant 0 : index
    %79 = vector.load %arg3[%c0_52, %c0_53, %c0_54] : memref<3x128x128xf32, #tpu.memory_space<vmem>>, vector<1x128x128xf32>
    %80 = vector.shape_cast %79 : vector<1x128x128xf32> to vector<128x128xf32>
    %cst_55 = arith.constant dense<0.000000e+00> : vector<34x128xf32>
    %81 = tpu.matmul %78, %80, %cst_55 {dimension_numbers = #tpu.dot_dimension_numbers<[1], [0], [0], [1], [0, 0, 1, 1], [], []>} : vector<34x128xf32>, vector<128x128xf32>, vector<34x128xf32> -> vector<34x128xf32>
    %82 = arith.addf %77, %81 : vector<34x128xf32>
    %c1_56 = arith.constant 1 : index
    %c0_57 = arith.constant 0 : index
    %83 = vector.load %arg11[%c1_56, %c0_57] : memref<36x128xf32, #tpu.memory_space<vmem>>, vector<34x128xf32>
    %c1_58 = arith.constant 1 : index
    %c0_59 = arith.constant 0 : index
    %c0_60 = arith.constant 0 : index
    %84 = vector.load %arg3[%c1_58, %c0_59, %c0_60] : memref<3x128x128xf32, #tpu.memory_space<vmem>>, vector<1x128x128xf32>
    %85 = vector.shape_cast %84 : vector<1x128x128xf32> to vector<128x128xf32>
    %cst_61 = arith.constant dense<0.000000e+00> : vector<34x128xf32>
    %86 = tpu.matmul %83, %85, %cst_61 {dimension_numbers = #tpu.dot_dimension_numbers<[1], [0], [0], [1], [0, 0, 1, 1], [], []>} : vector<34x128xf32>, vector<128x128xf32>, vector<34x128xf32> -> vector<34x128xf32>
    %87 = arith.addf %82, %86 : vector<34x128xf32>
    %c2_62 = arith.constant 2 : index
    %c0_63 = arith.constant 0 : index
    %88 = vector.load %arg11[%c2_62, %c0_63] : memref<36x128xf32, #tpu.memory_space<vmem>>, vector<34x128xf32>
    %c2_64 = arith.constant 2 : index
    %c0_65 = arith.constant 0 : index
    %c0_66 = arith.constant 0 : index
    %89 = vector.load %arg3[%c2_64, %c0_65, %c0_66] : memref<3x128x128xf32, #tpu.memory_space<vmem>>, vector<1x128x128xf32>
    %90 = vector.shape_cast %89 : vector<1x128x128xf32> to vector<128x128xf32>
    %cst_67 = arith.constant dense<0.000000e+00> : vector<34x128xf32>
    %91 = tpu.matmul %88, %90, %cst_67 {dimension_numbers = #tpu.dot_dimension_numbers<[1], [0], [0], [1], [0, 0, 1, 1], [], []>} : vector<34x128xf32>, vector<128x128xf32>, vector<34x128xf32> -> vector<34x128xf32>
    %92 = arith.addf %87, %91 : vector<34x128xf32>
    %93 = vector.broadcast %26 : vector<34x1xf32> to vector<34x128xf32>
    %94 = arith.mulf %92, %93 : vector<34x128xf32>
    %cst_68 = arith.constant dense<0.000000e+00> : vector<128xf32>
    %95 = vector.multi_reduction <add>, %94, %cst_68 [0] : vector<34x128xf32> to vector<128xf32>
    %96 = vector.shape_cast %95 : vector<128xf32> to vector<1x128xf32>
    %cst_69 = arith.constant dense<0.000000e+00> : vector<1x128xf32>
    %97 = tpu.matmul %96, %27, %cst_69 {dimension_numbers = #tpu.dot_dimension_numbers<[1], [0], [0], [1], [0, 0, 1, 1], [], []>} : vector<1x128xf32>, vector<128x128xf32>, vector<1x128xf32> -> vector<1x128xf32>
    %98 = vector.broadcast %97 : vector<1x128xf32> to vector<34x128xf32>
    %99 = arith.subf %92, %98 : vector<34x128xf32>
    %100 = arith.mulf %99, %99 : vector<34x128xf32>
    %101 = vector.broadcast %26 : vector<34x1xf32> to vector<34x128xf32>
    %102 = arith.mulf %100, %101 : vector<34x128xf32>
    %cst_70 = arith.constant dense<0.000000e+00> : vector<128xf32>
    %103 = vector.multi_reduction <add>, %102, %cst_70 [0] : vector<34x128xf32> to vector<128xf32>
    %104 = vector.shape_cast %103 : vector<128xf32> to vector<1x128xf32>
    %cst_71 = arith.constant dense<0.000000e+00> : vector<1x128xf32>
    %105 = tpu.matmul %104, %27, %cst_71 {dimension_numbers = #tpu.dot_dimension_numbers<[1], [0], [0], [1], [0, 0, 1, 1], [], []>} : vector<1x128xf32>, vector<128x128xf32>, vector<1x128xf32> -> vector<1x128xf32>
    %cst_72 = arith.constant 9.99999974E-6 : f32
    %106 = vector.broadcast %cst_72 : f32 to vector<1x128xf32>
    %107 = arith.addf %105, %106 : vector<1x128xf32>
    %108 = math.rsqrt %107 : vector<1x128xf32>
    %109 = arith.mulf %75, %108 : vector<1x128xf32>
    %110 = vector.broadcast %109 : vector<1x128xf32> to vector<34x128xf32>
    %111 = arith.mulf %99, %110 : vector<34x128xf32>
    %112 = vector.broadcast %76 : vector<1x128xf32> to vector<34x128xf32>
    %113 = arith.addf %111, %112 : vector<34x128xf32>
    %cst_73 = arith.constant 0.000000e+00 : f32
    %114 = vector.broadcast %cst_73 : f32 to vector<34x128xf32>
    %115 = arith.maximumf %113, %114 : vector<34x128xf32>
    %116 = vector.extract_strided_slice %115 {offsets = [0, 0], sizes = [16, 128], strides = [1, 1]} : vector<34x128xf32> to vector<16x128xf32>
    %c0_74 = arith.constant 0 : index
    %c0_75 = arith.constant 0 : index
    %117 = vector.load %arg9[%c0_74, %c0_75] : memref<32x128xf32, #tpu.memory_space<vmem>>, vector<16x128xf32>
    tpu.vector_store %arg9[%c0_74, %c0_75], %116 {strides = array<i32>} : memref<32x128xf32, #tpu.memory_space<vmem>>, vector<16x128xf32>,
    %118 = vector.extract_strided_slice %115 {offsets = [18, 0], sizes = [16, 128], strides = [1, 1]} : vector<34x128xf32> to vector<16x128xf32>
    %c16_76 = arith.constant 16 : index
    %c0_77 = arith.constant 0 : index
    %119 = vector.load %arg9[%c16_76, %c0_77] : memref<32x128xf32, #tpu.memory_space<vmem>>, vector<16x128xf32>
    tpu.vector_store %arg9[%c16_76, %c0_77], %118 {strides = array<i32>} : memref<32x128xf32, #tpu.memory_space<vmem>>, vector<16x128xf32>,
    return
  }
  func.func @transform_0(%arg0: i32) -> (i32, i32) {
    %c0_i32 = arith.constant 0 : i32
    %c0_i32_0 = arith.constant 0 : i32
    %c0_i32_1 = arith.constant 0 : i32
    return %c0_i32, %c0_i32_0 : i32, i32
  }
  func.func @transform_1(%arg0: i32) -> (i32, i32, i32) {
    %c0_i32 = arith.constant 0 : i32
    %c0_i32_0 = arith.constant 0 : i32
    %c0_i32_1 = arith.constant 0 : i32
    %c0_i32_2 = arith.constant 0 : i32
    return %c0_i32, %c0_i32_0, %c0_i32_1 : i32, i32, i32
  }
  func.func @transform_2(%arg0: i32) -> (i32, i32, i32) {
    %c0_i32 = arith.constant 0 : i32
    %c0_i32_0 = arith.constant 0 : i32
    %c0_i32_1 = arith.constant 0 : i32
    %c0_i32_2 = arith.constant 0 : i32
    return %c0_i32, %c0_i32_0, %c0_i32_1 : i32, i32, i32
  }
  func.func @transform_3(%arg0: i32) -> (i32, i32) {
    %c0_i32 = arith.constant 0 : i32
    %c0_i32_0 = arith.constant 0 : i32
    %c0_i32_1 = arith.constant 0 : i32
    return %c0_i32, %c0_i32_0 : i32, i32
  }
  func.func @transform_4(%arg0: i32) -> (i32, i32) {
    %c0_i32 = arith.constant 0 : i32
    %c0_i32_0 = arith.constant 0 : i32
    %c0_i32_1 = arith.constant 0 : i32
    return %c0_i32, %c0_i32_0 : i32, i32
  }
  func.func @transform_5(%arg0: i32) -> (i32, i32) {
    %c0_i32 = arith.constant 0 : i32
    %c0_i32_0 = arith.constant 0 : i32
    %c0_i32_1 = arith.constant 0 : i32
    return %c0_i32, %c0_i32_0 : i32, i32
  }
  func.func @transform_6(%arg0: i32) -> (i32, i32) {
    %c0_i32 = arith.constant 0 : i32
    %c0_i32_0 = arith.constant 0 : i32
    %c0_i32_1 = arith.constant 0 : i32
    return %c0_i32, %c0_i32_0 : i32, i32
  }
  func.func @transform_7(%arg0: i32) -> (i32, i32) {
    %c0_i32 = arith.constant 0 : i32
    %c0_i32_0 = arith.constant 0 : i32
    %c0_i32_1 = arith.constant 0 : i32
    return %c0_i32, %c0_i32_0 : i32, i32
  }
  func.func @transform_8(%arg0: i32) -> (i32, i32) {
    %c0_i32 = arith.constant 0 : i32
    %c0_i32_0 = arith.constant 0 : i32
    %c0_i32_1 = arith.constant 0 : i32
    return %c0_i32, %c0_i32_0 : i32, i32
  }
}

</mosaic_0001>

<llo_original>
// kernel: conv_block_forward.1
$region0: #{conv_block_forward.1}
  #allocation0 [shape = 'u32[]', space=smem, size = 0x4, offset = 0x4, fixed_abs, tag = 'smem constant byte address 0x4 - core index']
  #allocation1 [shape = 'u32[72,128]{1,0:T(1,128)}', space=vmem, size = 0x9000, scoped, tag = 'internal scratch']
  #allocation2 [shape = 'f32[36,64]{1,0:T(8,128)}', space=vmem, size = 0x5000, scoped, tag = 'scratch operand']
  #allocation3 [shape = 'f32[36,128]{1,0:T(8,128)}', space=vmem, size = 0x5000, scoped, tag = 'scratch operand']
  %s0 = inlined_call_operand.vmem [shape: f32[32,64], index: 0, kind: input, shape index: {}]
  %s1 = inlined_call_operand.vmem [shape: f32[3,64,128], index: 1, kind: input, shape index: {}]
  %s2 = inlined_call_operand.vmem [shape: f32[3,128,128], index: 2, kind: input, shape index: {}]
  %s3 = inlined_call_operand.vmem [shape: f32[128,128], index: 3, kind: input, shape index: {}]
  %s4 = inlined_call_operand.vmem [shape: f32[1,128], index: 4, kind: input, shape index: {}]
  %s5 = inlined_call_operand.vmem [shape: f32[1,128], index: 5, kind: input, shape index: {}]
  %s6 = inlined_call_operand.vmem [shape: f32[1,128], index: 6, kind: input, shape index: {}]
  %s7 = inlined_call_operand.vmem [shape: f32[1,128], index: 7, kind: input, shape index: {}]
  %s8 = inlined_call_operand.vmem [shape: f32[32,128], index: 8, kind: output, shape index: {}]
  %s9 = sld [smem:[#allocation0]]
  $region42: #{conv_block_forward.1} parent=0
    _
  %s11 = ssub.s32 1, %s9
  %s12 = scalar_select 0, %s11, %s9
  // Predicated region
  $region2: #{conv_block_forward.1} parent=0 // pred_check
    _
  $region3: #{conv_block_forward.1} parent=0 // pred_check_branch
    %14 = sbr.rel (0) target = $region5
  $region4: #{conv_block_forward.1} parent=0 // pred_region
    _
  $region5: #{conv_block_forward.1} parent=0 // pred_fallthru
    _
  // Predicated region
  $region6: #{conv_block_forward.1} parent=0 // pred_check
    _
  $region7: #{conv_block_forward.1} parent=0 // pred_check_branch
    %16 = sbr.rel (0) target = $region9
  $region8: #{conv_block_forward.1} parent=0 // pred_region
    _
  $region9: #{conv_block_forward.1} parent=0 // pred_fallthru
    _
  // Predicated region
  $region10: #{conv_block_forward.1} parent=0 // pred_check
    _
  $region11: #{conv_block_forward.1} parent=0 // pred_check_branch
    %18 = sbr.rel (0) target = $region13
  $region12: #{conv_block_forward.1} parent=0 // pred_region
    _
  $region13: #{conv_block_forward.1} parent=0 // pred_fallthru
    _
  // Predicated region
  $region14: #{conv_block_forward.1} parent=0 // pred_check
    _
  $region15: #{conv_block_forward.1} parent=0 // pred_check_branch
    %20 = sbr.rel (0) target = $region17
  $region16: #{conv_block_forward.1} parent=0 // pred_region
    _
  $region17: #{conv_block_forward.1} parent=0 // pred_fallthru
    _
  // Predicated region
  $region18: #{conv_block_forward.1} parent=0 // pred_check
    _
  $region19: #{conv_block_forward.1} parent=0 // pred_check_branch
    %22 = sbr.rel (0) target = $region21
  $region20: #{conv_block_forward.1} parent=0 // pred_region
    _
  $region21: #{conv_block_forward.1} parent=0 // pred_fallthru
    _
  // Predicated region
  $region22: #{conv_block_forward.1} parent=0 // pred_check
    _
  $region23: #{conv_block_forward.1} parent=0 // pred_check_branch
    %24 = sbr.rel (0) target = $region25
  $region24: #{conv_block_forward.1} parent=0 // pred_region
    _
  $region25: #{conv_block_forward.1} parent=0 // pred_fallthru
    _
  // Predicated region
  $region26: #{conv_block_forward.1} parent=0 // pred_check
    _
  $region27: #{conv_block_forward.1} parent=0 // pred_check_branch
    %26 = sbr.rel (0) target = $region29
  $region28: #{conv_block_forward.1} parent=0 // pred_region
    _
  $region29: #{conv_block_forward.1} parent=0 // pred_fallthru
    _
  // Predicated region
  $region30: #{conv_block_forward.1} parent=0 // pred_check
    _
  $region31: #{conv_block_forward.1} parent=0 // pred_check_branch
    %28 = sbr.rel (0) target = $region33
  $region32: #{conv_block_forward.1} parent=0 // pred_region
    _
  $region33: #{conv_block_forward.1} parent=0 // pred_fallthru
    _
  %vm29 = vcmask 523264
  %30 = vst.msk [vmem:[#allocation2] sm:$0xff] %vm29, 0.0
  %31 = vst.msk [vmem:[#allocation2 + $0x8] sm:$0xff] %vm29, 0.0
  %32 = vst.msk [vmem:[#allocation2 + $0x10] sm:$0xff] %vm29, 0.0
  %33 = vst.msk [vmem:[#allocation2 + $0x18] sm:$0xff] %vm29, 0.0
  %vm34 = vcmask 519168
  %35 = vst.msk [vmem:[#allocation2 + $0x20] sm:$0xf] %vm34, 0.0
  %v36 = vld [vmem:[%s0] sm:$0xff]
  %v37 = vld [vmem:[%s0 + $0x8] sm:$0xff]
  %38 = vst.msk [vmem:[#allocation2 + $0x1] sm:$0xff] %vm29, %v36
  %39 = vst.msk [vmem:[#allocation2 + $0x9] sm:$0xff] %vm29, %v37
  %v40 = vld [vmem:[%s0 + $0x10] sm:$0xff]
  %v41 = vld [vmem:[%s0 + $0x18] sm:$0xff]
  %42 = vst.msk [vmem:[#allocation2 + $0x13] sm:$0xff] %vm29, %v40
  %43 = vst.msk [vmem:[#allocation2 + $0x1b] sm:$0xff] %vm29, %v41
  %v44 = vlaneseq
  %v45 = vshrl.u32 %v44, 7
  %v46 = vadd.s32 %v45, 8
  %v47 = vadd.s32 %v45, 16
  %v48 = vadd.s32 %v45, 24
  %v49 = vadd.s32 %v45, 32
  %vm50 = vcmp.lt.s32.totalorder %v45, 0
  %v51 = vsub.s32 0, %v45
  %v52 = vsel %vm50, %v51, %v45
  %v53 = vand.u32 %v52, 65535
  %v54 = vshrl.u32 %v52, 16
  %v56 = vmul.u32 %v53, 14564
  %v57 = vmul.u32 %v53, 58254
  %v58 = vmul.u32 %v54, 14564
  %v59 = vmul.u32 %v54, 58254
  %v60 = vshll.u32 %v57, 16
  %v61 = vshrl.u32 %v57, 16
  %v62 = vshll.u32 %v58, 16
  %v63 = vshrl.u32 %v58, 16
  %vm64 = vc.u32 %v56, %v60
  %v65 = vsel %vm64, 1, 0
  %v66 = vadd.s32 %v56, %v60
  %v67 = vadd.s32 %v59, %v65
  %vm68 = vc.u32 %v66, %v62
  %v69 = vsel %vm68, 1, 0
  %v70 = vadd.s32 %v66, %v62
  %v71 = vadd.s32 %v67, %v69
  %v72 = vadd.s32 %v71, %v61
  %v73 = vadd.s32 %v72, %v63
  %v74 = vshrl.u32 %v73, 4
  %v75 = vmul.u32 %v74, 18
  %v76 = vsub.s32 %v52, %v75
  %v77 = vsub.s32 0, %v76
  %v78 = vsel %vm50, %v77, %v76
  %vm79 = vcmp.lt.s32.totalorder %v46, 0
  %v80 = vsub.s32 0, %v46
  %v81 = vsel %vm79, %v80, %v46
  %v82 = vand.u32 %v81, 65535
  %v83 = vshrl.u32 %v81, 16
  %v85 = vmul.u32 %v82, 14564
  %v86 = vmul.u32 %v82, 58254
  %v87 = vmul.u32 %v83, 14564
  %v88 = vmul.u32 %v83, 58254
  %v89 = vshll.u32 %v86, 16
  %v90 = vshrl.u32 %v86, 16
  %v91 = vshll.u32 %v87, 16
  %v92 = vshrl.u32 %v87, 16
  %vm93 = vc.u32 %v85, %v89
  %v94 = vsel %vm93, 1, 0
  %v95 = vadd.s32 %v85, %v89
  %v96 = vadd.s32 %v88, %v94
  %vm97 = vc.u32 %v95, %v91
  %v98 = vsel %vm97, 1, 0
  %v99 = vadd.s32 %v95, %v91
  %v100 = vadd.s32 %v96, %v98
  %v101 = vadd.s32 %v100, %v90
  %v102 = vadd.s32 %v101, %v92
  %v103 = vshrl.u32 %v102, 4
  %v104 = vmul.u32 %v103, 18
  %v105 = vsub.s32 %v81, %v104
  %v106 = vsub.s32 0, %v105
  %v107 = vsel %vm79, %v106, %v105
  %vm108 = vcmp.lt.s32.totalorder %v47, 0
  %v109 = vsub.s32 0, %v47
  %v110 = vsel %vm108, %v109, %v47
  %v111 = vand.u32 %v110, 65535
  %v112 = vshrl.u32 %v110, 16
  %v114 = vmul.u32 %v111, 14564
  %v115 = vmul.u32 %v111, 58254
  %v116 = vmul.u32 %v112, 14564
  %v117 = vmul.u32 %v112, 58254
  %v118 = vshll.u32 %v115, 16
  %v119 = vshrl.u32 %v115, 16
  %v120 = vshll.u32 %v116, 16
  %v121 = vshrl.u32 %v116, 16
  %vm122 = vc.u32 %v114, %v118
  %v123 = vsel %vm122, 1, 0
  %v124 = vadd.s32 %v114, %v118
  %v125 = vadd.s32 %v117, %v123
  %vm126 = vc.u32 %v124, %v120
  %v127 = vsel %vm126, 1, 0
  %v128 = vadd.s32 %v124, %v120
  %v129 = vadd.s32 %v125, %v127
  %v130 = vadd.s32 %v129, %v119
  %v131 = vadd.s32 %v130, %v121
  %v132 = vshrl.u32 %v131, 4
  %v133 = vmul.u32 %v132, 18
  %v134 = vsub.s32 %v110, %v133
  %v135 = vsub.s32 0, %v134
  %v136 = vsel %vm108, %v135, %v134
  %vm137 = vcmp.lt.s32.totalorder %v48, 0
  %v138 = vsub.s32 0, %v48
  %v139 = vsel %vm137, %v138, %v48
  %v140 = vand.u32 %v139, 65535
  %v141 = vshrl.u32 %v139, 16
  %v143 = vmul.u32 %v140, 14564
  %v144 = vmul.u32 %v140, 58254
  %v145 = vmul.u32 %v141, 14564
  %v146 = vmul.u32 %v141, 58254
  %v147 = vshll.u32 %v144, 16
  %v148 = vshrl.u32 %v144, 16
  %v149 = vshll.u32 %v145, 16
  %v150 = vshrl.u32 %v145, 16
  %vm151 = vc.u32 %v143, %v147
  %v152 = vsel %vm151, 1, 0
  %v153 = vadd.s32 %v143, %v147
  %v154 = vadd.s32 %v146, %v152
  %vm155 = vc.u32 %v153, %v149
  %v156 = vsel %vm155, 1, 0
  %v157 = vadd.s32 %v153, %v149
  %v158 = vadd.s32 %v154, %v156
  %v159 = vadd.s32 %v158, %v148
  %v160 = vadd.s32 %v159, %v150
  %v161 = vshrl.u32 %v160, 4
  %v162 = vmul.u32 %v161, 18
  %v163 = vsub.s32 %v139, %v162
  %v164 = vsub.s32 0, %v163
  %v165 = vsel %vm137, %v164, %v163
  %vm166 = vcmp.lt.s32.totalorder %v49, 0
  %v167 = vsub.s32 0, %v49
  %v168 = vsel %vm166, %v167, %v49
  %v169 = vand.u32 %v168, 65535
  %v170 = vshrl.u32 %v168, 16
  %v172 = vmul.u32 %v169, 14564
  %v173 = vmul.u32 %v169, 58254
  %v174 = vmul.u32 %v170, 14564
  %v175 = vmul.u32 %v170, 58254
  %v176 = vshll.u32 %v173, 16
  %v177 = vshrl.u32 %v173, 16
  %v178 = vshll.u32 %v174, 16
  %v179 = vshrl.u32 %v174, 16
  %vm180 = vc.u32 %v172, %v176
  %v181 = vsel %vm180, 1, 0
  %v182 = vadd.s32 %v172, %v176
  %v183 = vadd.s32 %v175, %v181
  %vm184 = vc.u32 %v182, %v178
  %v185 = vsel %vm184, 1, 0
  %v186 = vadd.s32 %v182, %v178
  %v187 = vadd.s32 %v183, %v185
  %v188 = vadd.s32 %v187, %v177
  %v189 = vadd.s32 %v188, %v179
  %v190 = vshrl.u32 %v189, 4
  %v191 = vmul.u32 %v190, 18
  %v192 = vsub.s32 %v168, %v191
  %v193 = vsub.s32 0, %v192
  %v194 = vsel %vm166, %v193, %v192
  %vm195 = vcmp.ne.s32.totalorder %v78, 0
  %vm196 = vcmp.ne.s32.totalorder %v107, 0
  %vm197 = vcmp.ne.s32.totalorder %v136, 0
  %vm198 = vcmp.ne.s32.totalorder %v165, 0
  %vm199 = vcmp.ne.s32.totalorder %v194, 0
  %vm200 = vcmp.lt.s32.totalorder %v78, 0
  %vm201 = vcmp.lt.s32.totalorder %v107, 0
  %vm202 = vcmp.lt.s32.totalorder %v136, 0
  %vm203 = vcmp.lt.s32.totalorder %v165, 0
  %vm204 = vcmp.lt.s32.totalorder %v194, 0
  %vm205 = vmand %vm200, %vm195
  %vm206 = vmand %vm201, %vm196
  %vm207 = vmand %vm202, %vm197
  %vm208 = vmand %vm203, %vm198
  %vm209 = vmand %vm204, %vm199
  %v210 = vadd.s32 %v78, 18
  %v211 = vadd.s32 %v107, 18
  %v212 = vadd.s32 %v136, 18
  %v213 = vadd.s32 %v165, 18
  %v214 = vadd.s32 %v194, 18
  %v215 = vsel %vm205, %v210, %v78
  %v216 = vsel %vm206, %v211, %v107
  %v217 = vsel %vm207, %v212, %v136
  %v218 = vsel %vm208, %v213, %v165
  %v219 = vsel %vm209, %v214, %v194
  %vm220 = vcmp.lt.s32.totalorder %v215, 16
  %vm221 = vcmp.lt.s32.totalorder %v216, 16
  %vm222 = vcmp.lt.s32.totalorder %v217, 16
  %vm223 = vcmp.lt.s32.totalorder %v218, 16
  %vm224 = vcmp.lt.s32.totalorder %v219, 16
  %v225 = vsel %vm220, 1, 0
  %v226 = vsel %vm221, 1, 0
  %v227 = vsel %vm222, 1, 0
  %v228 = vsel %vm223, 1, 0
  %v229 = vsel %vm224, 1, 0
  %v230 = vcvt.s32.f32 %v225
  %v231 = vcvt.s32.f32 %v226
  %v232 = vcvt.s32.f32 %v227
  %v233 = vcvt.s32.f32 %v228
  %v234 = vcvt.s32.f32 %v229
  %v235 = vld [vmem:[%s3] sm:$0xff]
  %v236 = vld [vmem:[%s3 + $0x8] sm:$0xff]
  %v237 = vld [vmem:[%s3 + $0x10] sm:$0xff]
  %v238 = vld [vmem:[%s3 + $0x18] sm:$0xff]
  %v239 = vld [vmem:[%s3 + $0x20] sm:$0xff]
  %v240 = vld [vmem:[%s3 + $0x28] sm:$0xff]
  %v241 = vld [vmem:[%s3 + $0x30] sm:$0xff]
  %v242 = vld [vmem:[%s3 + $0x38] sm:$0xff]
  %v243 = vld [vmem:[%s3 + $0x40] sm:$0xff]
  %v244 = vld [vmem:[%s3 + $0x48] sm:$0xff]
  %v245 = vld [vmem:[%s3 + $0x50] sm:$0xff]
  %v246 = vld [vmem:[%s3 + $0x58] sm:$0xff]
  %v247 = vld [vmem:[%s3 + $0x60] sm:$0xff]
  %v248 = vld [vmem:[%s3 + $0x68] sm:$0xff]
  %v249 = vld [vmem:[%s3 + $0x70] sm:$0xff]
  %v250 = vld [vmem:[%s3 + $0x78] sm:$0xff]
  %v251 = vld [vmem:[%s4] sm:$0x1]
  %v252 = vld [vmem:[%s5] sm:$0x1]
  %v253 = vld [vmem:[#allocation2] sm:$0xff]
  %v254 = vld [vmem:[#allocation2 + $0x8] sm:$0xff]
  %v255 = vld [vmem:[#allocation2 + $0x10] sm:$0xff]
  %v256 = vld [vmem:[#allocation2 + $0x18] sm:$0xff]
  %v257 = vld [vmem:[#allocation2 + $0x20] sm:$0x3]
  %v258 = vld [vmem:[%s1] sm:$0xff]
  %v259 = vld [vmem:[%s1 + $0x8] sm:$0xff]
  %v260 = vld [vmem:[%s1 + $0x10] sm:$0xff]
  %v261 = vld [vmem:[%s1 + $0x18] sm:$0xff]
  %v262 = vld [vmem:[%s1 + $0x20] sm:$0xff]
  %v263 = vld [vmem:[%s1 + $0x28] sm:$0xff]
  %v264 = vld [vmem:[%s1 + $0x30] sm:$0xff]
  %v265 = vld [vmem:[%s1 + $0x38] sm:$0xff]
  %v266 = vld [vmem:[#allocation2 + $0x1] sm:$0xff]
  %v267 = vld [vmem:[#allocation2 + $0x9] sm:$0xff]
  %v268 = vld [vmem:[#allocation2 + $0x11] sm:$0xff]
  %v269 = vld [vmem:[#allocation2 + $0x19] sm:$0xff]
  %v270 = vld [vmem:[#allocation2 + $0x21] sm:$0x3]
  %s271 = scalar_lea.vmem %s1, 64
  %v272 = vld [vmem:[%s271] sm:$0xff]
  %v273 = vld [vmem:[%s271 + $0x8] sm:$0xff]
  %v274 = vld [vmem:[%s271 + $0x10] sm:$0xff]
  %v275 = vld [vmem:[%s271 + $0x18] sm:$0xff]
  %v276 = vld [vmem:[%s271 + $0x20] sm:$0xff]
  %v277 = vld [vmem:[%s271 + $0x28] sm:$0xff]
  %v278 = vld [vmem:[%s271 + $0x30] sm:$0xff]
  %v279 = vld [vmem:[%s271 + $0x38] sm:$0xff]
  %v281 = vsel %vm29, %v266, 0
  %v284 = vsel %vm29, %v267, 0
  %v287 = vsel %vm29, %v268, 0
  %v290 = vsel %vm29, %v269, 0
  %v293 = vsel %vm29, %v270, 0
  %295 = vmatpush.msra.mxu0 0.0
  %296 = vmatpush.msra.mxu0 0.0
  %297 = vmatpush.msra.mxu0 0.0
  %298 = vmatpush.msra.mxu0 0.0
  %299 = vmatpush.msra.mxu0 0.0
  %300 = vmatpush.msra.mxu0 0.0
  %301 = vmatpush.msra.mxu0 0.0
  %302 = vmatpush.msra.mxu0 0.0
  %303 = vmatpush.msra.mxu0 %v279
  %304 = vmatpush.msra.mxu0 %v278
  %305 = vmatpush.msra.mxu0 %v277
  %306 = vmatpush.msra.mxu0 %v276
  %307 = vmatpush.msra.mxu0 %v275
  %308 = vmatpush.msra.mxu0 %v274
  %309 = vmatpush.msra.mxu0 %v273
  %310 = vmatpush.msra.mxu0 %v272
  %311 = vmatmul.f32.gmra.mxu0 %v281
  %v312 = vpop.f32.mrf.mxu0
  %v313 = vadd.f32 0.0, %v312
  %314 = vmatmul.f32.gmra.mxu0 %v284
  %v315 = vpop.f32.mrf.mxu0
  %v316 = vadd.f32 0.0, %v315
  %317 = vmatmul.f32.gmra.mxu0 %v287
  %v318 = vpop.f32.mrf.mxu0
  %v319 = vadd.f32 0.0, %v318
  %320 = vmatmul.f32.gmra.mxu0 %v290
  %v321 = vpop.f32.mrf.mxu0
  %v322 = vadd.f32 0.0, %v321
  %323 = vmatmul.f32.gmra.mxu0 %v293
  %v324 = vpop.f32.mrf.mxu0
  %v325 = vadd.f32 0.0, %v324
  %326 = vdwg.mxu0
  %v328 = vsel %vm29, %v253, 0
  %v331 = vsel %vm29, %v254, 0
  %v334 = vsel %vm29, %v255, 0
  %v337 = vsel %vm29, %v256, 0
  %v340 = vsel %vm29, %v257, 0
  %342 = vmatpush.msra.mxu0 0.0
  %343 = vmatpush.msra.mxu0 0.0
  %344 = vmatpush.msra.mxu0 0.0
  %345 = vmatpush.msra.mxu0 0.0
  %346 = vmatpush.msra.mxu0 0.0
  %347 = vmatpush.msra.mxu0 0.0
  %348 = vmatpush.msra.mxu0 0.0
  %349 = vmatpush.msra.mxu0 0.0
  %350 = vmatpush.msra.mxu0 %v265
  %351 = vmatpush.msra.mxu0 %v264
  %352 = vmatpush.msra.mxu0 %v263
  %353 = vmatpush.msra.mxu0 %v262
  %354 = vmatpush.msra.mxu0 %v261
  %355 = vmatpush.msra.mxu0 %v260
  %356 = vmatpush.msra.mxu0 %v259
  %357 = vmatpush.msra.mxu0 %v258
  %358 = vmatmul.f32.gmra.mxu0 %v328
  %v359 = vpop.f32.mrf.mxu0
  %v360 = vadd.f32 %v313, %v359
  %361 = vmatmul.f32.gmra.mxu0 %v331
  %v362 = vpop.f32.mrf.mxu0
  %v363 = vadd.f32 %v316, %v362
  %364 = vmatmul.f32.gmra.mxu0 %v334
  %v365 = vpop.f32.mrf.mxu0
  %v366 = vadd.f32 %v319, %v365
  %367 = vmatmul.f32.gmra.mxu0 %v337
  %v368 = vpop.f32.mrf.mxu0
  %v369 = vadd.f32 %v322, %v368
  %370 = vmatmul.f32.gmra.mxu0 %v340
  %v371 = vpop.f32.mrf.mxu0
  %v372 = vadd.f32 %v325, %v371
  %373 = vdwg.mxu0
  %v374 = vld [vmem:[#allocation2 + $0x2] sm:$0xff]
  %v375 = vld [vmem:[#allocation2 + $0xa] sm:$0xff]
  %v376 = vld [vmem:[#allocation2 + $0x12] sm:$0xff]
  %v377 = vld [vmem:[#allocation2 + $0x1a] sm:$0xff]
  %v378 = vld [vmem:[#allocation2 + $0x22] sm:$0x3]
  %s379 = scalar_lea.vmem %s1, 128
  %v380 = vld [vmem:[%s379] sm:$0xff]
  %v381 = vld [vmem:[%s379 + $0x8] sm:$0xff]
  %v382 = vld [vmem:[%s379 + $0x10] sm:$0xff]
  %v383 = vld [vmem:[%s379 + $0x18] sm:$0xff]
  %v384 = vld [vmem:[%s379 + $0x20] sm:$0xff]
  %v385 = vld [vmem:[%s379 + $0x28] sm:$0xff]
  %v386 = vld [vmem:[%s379 + $0x30] sm:$0xff]
  %v387 = vld [vmem:[%s379 + $0x38] sm:$0xff]
  %v389 = vsel %vm29, %v374, 0
  %v392 = vsel %vm29, %v375, 0
  %v395 = vsel %vm29, %v376, 0
  %v398 = vsel %vm29, %v377, 0
  %v401 = vsel %vm29, %v378, 0
  %403 = vmatpush.msra.mxu0 0.0
  %404 = vmatpush.msra.mxu0 0.0
  %405 = vmatpush.msra.mxu0 0.0
  %406 = vmatpush.msra.mxu0 0.0
  %407 = vmatpush.msra.mxu0 0.0
  %408 = vmatpush.msra.mxu0 0.0
  %409 = vmatpush.msra.mxu0 0.0
  %410 = vmatpush.msra.mxu0 0.0
  %411 = vmatpush.msra.mxu0 %v387
  %412 = vmatpush.msra.mxu0 %v386
  %413 = vmatpush.msra.mxu0 %v385
  %414 = vmatpush.msra.mxu0 %v384
  %415 = vmatpush.msra.mxu0 %v383
  %416 = vmatpush.msra.mxu0 %v382
  %417 = vmatpush.msra.mxu0 %v381
  %418 = vmatpush.msra.mxu0 %v380
  %419 = vmatmul.f32.gmra.mxu0 %v389
  %v420 = vpop.f32.mrf.mxu0
  %v421 = vadd.f32 0.0, %v420
  %422 = vmatmul.f32.gmra.mxu0 %v392
  %v423 = vpop.f32.mrf.mxu0
  %v424 = vadd.f32 0.0, %v423
  %425 = vmatmul.f32.gmra.mxu0 %v395
  %v426 = vpop.f32.mrf.mxu0
  %v427 = vadd.f32 0.0, %v426
  %428 = vmatmul.f32.gmra.mxu0 %v398
  %v429 = vpop.f32.mrf.mxu0
  %v430 = vadd.f32 0.0, %v429
  %431 = vmatmul.f32.gmra.mxu0 %v401
  %v432 = vpop.f32.mrf.mxu0
  %v433 = vadd.f32 0.0, %v432
  %434 = vdwg.mxu0
  %v435 = vadd.f32 %v360, %v421
  %v436 = vadd.f32 %v363, %v424
  %v437 = vadd.f32 %v366, %v427
  %v438 = vadd.f32 %v369, %v430
  %v439 = vadd.f32 %v372, %v433
  %v440 = vmul.f32 %v435, %v230
  %v441 = vmul.f32 %v436, %v231
  %v442 = vmul.f32 %v437, %v232
  %v443 = vmul.f32 %v438, %v233
  %v444 = vmul.f32 %v439, %v234
  %v445 = vadd.f32 %v440, %v441
  %v446 = vadd.f32 %v445, %v442
  %v447 = vadd.f32 %v446, %v443
  %vm448 = vcmask 1041408
  %v449 = vsel %vm448, %v444, 0.0
  %v450 = vadd.f32 %v447, %v449
  %v451 = vrot.slane %v450, 4
  %v452 = vadd.f32 %v450, %v451
  %v453 = vrot.slane %v452, 2
  %v454 = vadd.f32 %v452, %v453
  %v455 = vrot.slane %v454, 1
  %v456 = vadd.f32 %v454, %v455
  %457 = vmatpush.msra.mxu0 %v250
  %458 = vmatpush.msra.mxu0 %v249
  %459 = vmatpush.msra.mxu0 %v248
  %460 = vmatpush.msra.mxu0 %v247
  %461 = vmatpush.msra.mxu0 %v246
  %462 = vmatpush.msra.mxu0 %v245
  %463 = vmatpush.msra.mxu0 %v244
  %464 = vmatpush.msra.mxu0 %v243
  %465 = vmatpush.msra.mxu0 %v242
  %466 = vmatpush.msra.mxu0 %v241
  %467 = vmatpush.msra.mxu0 %v240
  %468 = vmatpush.msra.mxu0 %v239
  %469 = vmatpush.msra.mxu0 %v238
  %470 = vmatpush.msra.mxu0 %v237
  %471 = vmatpush.msra.mxu0 %v236
  %472 = vmatpush.msra.mxu0 %v235
  %473 = vmatmul.f32.gmra.mxu0 %v456
  %v474 = vpop.f32.mrf.mxu0
  %v475 = vadd.f32 0.0, %v474
  %476 = vdwg.mxu0
  %v477 = vperm.slane %v475, 0
  %v478 = vsub.f32 %v435, %v477
  %v479 = vsub.f32 %v436, %v477
  %v480 = vsub.f32 %v437, %v477
  %v481 = vsub.f32 %v438, %v477
  %v482 = vsub.f32 %v439, %v477
  %v483 = vmul.f32 %v478, %v478
  %v484 = vmul.f32 %v479, %v479
  %v485 = vmul.f32 %v480, %v480
  %v486 = vmul.f32 %v481, %v481
  %v487 = vmul.f32 %v482, %v482
  %v488 = vmul.f32 %v483, %v230
  %v489 = vmul.f32 %v484, %v231
  %v490 = vmul.f32 %v485, %v232
  %v491 = vmul.f32 %v486, %v233
  %v492 = vmul.f32 %v487, %v234
  %v493 = vadd.f32 %v488, %v489
  %v494 = vadd.f32 %v493, %v490
  %v495 = vadd.f32 %v494, %v491
  %v496 = vsel %vm448, %v492, 0.0
  %v497 = vadd.f32 %v495, %v496
  %v498 = vrot.slane %v497, 4
  %v499 = vadd.f32 %v497, %v498
  %v500 = vrot.slane %v499, 2
  %v501 = vadd.f32 %v499, %v500
  %v502 = vrot.slane %v501, 1
  %v503 = vadd.f32 %v501, %v502
  %504 = vmatpush.msra.mxu0 %v250
  %505 = vmatpush.msra.mxu0 %v249
  %506 = vmatpush.msra.mxu0 %v248
  %507 = vmatpush.msra.mxu0 %v247
  %508 = vmatpush.msra.mxu0 %v246
  %509 = vmatpush.msra.mxu0 %v245
  %510 = vmatpush.msra.mxu0 %v244
  %511 = vmatpush.msra.mxu0 %v243
  %512 = vmatpush.msra.mxu0 %v242
  %513 = vmatpush.msra.mxu0 %v241
  %514 = vmatpush.msra.mxu0 %v240
  %515 = vmatpush.msra.mxu0 %v239
  %516 = vmatpush.msra.mxu0 %v238
  %517 = vmatpush.msra.mxu0 %v237
  %518 = vmatpush.msra.mxu0 %v236
  %519 = vmatpush.msra.mxu0 %v235
  %520 = vmatmul.f32.gmra.mxu0 %v503
  %v521 = vpop.f32.mrf.mxu0
  %v522 = vadd.f32 1e-05, %v521
  %523 = vdwg.mxu0
  %v524 = vrsqrt.pop %v522
  %v525 = vmul.f32 %v524, %v522
  %v526 = vmul.f32 %v525, %v524
  %v527 = vmul.f32 0.5, %v526
  %v528 = vsub.f32 1.5, %v527
  %v529 = vmul.f32 %v524, %v528
  %vm530 = vweird.f32 %v522
  %vm531 = vweird.f32 %v524
  %vm532 = vmor %vm530, %vm531
  %v533 = vsel %vm532, %v524, %v529
  %v534 = vmul.f32 %v251, %v533
  %v536 = vperm.slane %v534, 0
  %v538 = vmul.f32 %v478, %v536
  %v539 = vmul.f32 %v479, %v536
  %v540 = vmul.f32 %v480, %v536
  %v541 = vmul.f32 %v481, %v536
  %v542 = vmul.f32 %v482, %v536
  %v544 = vperm.slane %v252, 0
  %v546 = vadd.f32 %v538, %v544
  %v547 = vadd.f32 %v539, %v544
  %v548 = vadd.f32 %v540, %v544
  %v549 = vadd.f32 %v541, %v544
  %v550 = vadd.f32 %v542, %v544
  %v551 = vmax.f32 %v546, 0.0
  %v552 = vmax.f32 %v547, 0.0
  %v553 = vmax.f32 %v548, 0.0
  %v554 = vmax.f32 %v549, 0.0
  %v555 = vmax.f32 %v550, 0.0
  %556 = vst [vmem:[#allocation3] sm:$0x1] 0.0
  %557 = vst [vmem:[#allocation3 + $0x23] sm:$0x1] 0.0
  %v558 = vmul.f32 %v551, %v230
  %v559 = vmul.f32 %v552, %v231
  %v560 = vmul.f32 %v553, %v232
  %v561 = vmul.f32 %v554, %v233
  %v562 = vmul.f32 %v555, %v234
  %563 = vst [vmem:[#allocation3 + $0x1] sm:$0xff] %v558
  %564 = vst [vmem:[#allocation3 + $0x9] sm:$0xff] %v559
  %565 = vst [vmem:[#allocation3 + $0x11] sm:$0xff] %v560
  %566 = vst [vmem:[#allocation3 + $0x19] sm:$0xff] %v561
  %567 = vst [vmem:[#allocation3 + $0x21] sm:$0x3] %v562
  %v568 = vld [vmem:[%s6] sm:$0x1]
  %v569 = vld [vmem:[%s7] sm:$0x1]
  %v570 = vld [vmem:[#allocation3] sm:$0xff]
  %v571 = vld [vmem:[#allocation3 + $0x8] sm:$0xff]
  %v572 = vld [vmem:[#allocation3 + $0x10] sm:$0xff]
  %v573 = vld [vmem:[#allocation3 + $0x18] sm:$0xff]
  %v574 = vld [vmem:[#allocation3 + $0x20] sm:$0x3]
  %v575 = vld [vmem:[%s2] sm:$0xff]
  %v576 = vld [vmem:[%s2 + $0x8] sm:$0xff]
  %v577 = vld [vmem:[%s2 + $0x10] sm:$0xff]
  %v578 = vld [vmem:[%s2 + $0x18] sm:$0xff]
  %v579 = vld [vmem:[%s2 + $0x20] sm:$0xff]
  %v580 = vld [vmem:[%s2 + $0x28] sm:$0xff]
  %v581 = vld [vmem:[%s2 + $0x30] sm:$0xff]
  %v582 = vld [vmem:[%s2 + $0x38] sm:$0xff]
  %v583 = vld [vmem:[%s2 + $0x40] sm:$0xff]
  %v584 = vld [vmem:[%s2 + $0x48] sm:$0xff]
  %v585 = vld [vmem:[%s2 + $0x50] sm:$0xff]
  %v586 = vld [vmem:[%s2 + $0x58] sm:$0xff]
  %v587 = vld [vmem:[%s2 + $0x60] sm:$0xff]
  %v588 = vld [vmem:[%s2 + $0x68] sm:$0xff]
  %v589 = vld [vmem:[%s2 + $0x70] sm:$0xff]
  %v590 = vld [vmem:[%s2 + $0x78] sm:$0xff]
  %v591 = vld [vmem:[#allocation3 + $0x1] sm:$0xff]
  %v592 = vld [vmem:[#allocation3 + $0x9] sm:$0xff]
  %v593 = vld [vmem:[#allocation3 + $0x11] sm:$0xff]
  %v594 = vld [vmem:[#allocation3 + $0x19] sm:$0xff]
  %v595 = vld [vmem:[#allocation3 + $0x21] sm:$0x3]
  %s596 = scalar_lea.vmem %s2, 128
  %v597 = vld [vmem:[%s596] sm:$0xff]
  %v598 = vld [vmem:[%s596 + $0x8] sm:$0xff]
  %v599 = vld [vmem:[%s596 + $0x10] sm:$0xff]
  %v600 = vld [vmem:[%s596 + $0x18] sm:$0xff]
  %v601 = vld [vmem:[%s596 + $0x20] sm:$0xff]
  %v602 = vld [vmem:[%s596 + $0x28] sm:$0xff]
  %v603 = vld [vmem:[%s596 + $0x30] sm:$0xff]
  %v604 = vld [vmem:[%s596 + $0x38] sm:$0xff]
  %v605 = vld [vmem:[%s596 + $0x40] sm:$0xff]
  %v606 = vld [vmem:[%s596 + $0x48] sm:$0xff]
  %v607 = vld [vmem:[%s596 + $0x50] sm:$0xff]
  %v608 = vld [vmem:[%s596 + $0x58] sm:$0xff]
  %v609 = vld [vmem:[%s596 + $0x60] sm:$0xff]
  %v610 = vld [vmem:[%s596 + $0x68] sm:$0xff]
  %v611 = vld [vmem:[%s596 + $0x70] sm:$0xff]
  %v612 = vld [vmem:[%s596 + $0x78] sm:$0xff]
  %613 = vmatpush.msra.mxu0 %v612
  %614 = vmatpush.msra.mxu0 %v611
  %615 = vmatpush.msra.mxu0 %v610
  %616 = vmatpush.msra.mxu0 %v609
  %617 = vmatpush.msra.mxu0 %v608
  %618 = vmatpush.msra.mxu0 %v607
  %619 = vmatpush.msra.mxu0 %v606
  %620 = vmatpush.msra.mxu0 %v605
  %621 = vmatpush.msra.mxu0 %v604
  %622 = vmatpush.msra.mxu0 %v603
  %623 = vmatpush.msra.mxu0 %v602
  %624 = vmatpush.msra.mxu0 %v601
  %625 = vmatpush.msra.mxu0 %v600
  %626 = vmatpush.msra.mxu0 %v599
  %627 = vmatpush.msra.mxu0 %v598
  %628 = vmatpush.msra.mxu0 %v597
  %629 = vmatmul.f32.gmra.mxu0 %v591
  %v630 = vpop.f32.mrf.mxu0
  %v631 = vadd.f32 0.0, %v630
  %632 = vmatmul.f32.gmra.mxu0 %v592
  %v633 = vpop.f32.mrf.mxu0
  %v634 = vadd.f32 0.0, %v633
  %635 = vmatmul.f32.gmra.mxu0 %v593
  %v636 = vpop.f32.mrf.mxu0
  %v637 = vadd.f32 0.0, %v636
  %638 = vmatmul.f32.gmra.mxu0 %v594
  %v639 = vpop.f32.mrf.mxu0
  %v640 = vadd.f32 0.0, %v639
  %641 = vmatmul.f32.gmra.mxu0 %v595
  %v642 = vpop.f32.mrf.mxu0
  %v643 = vadd.f32 0.0, %v642
  %644 = vdwg.mxu0
  %645 = vmatpush.msra.mxu0 %v590
  %646 = vmatpush.msra.mxu0 %v589
  %647 = vmatpush.msra.mxu0 %v588
  %648 = vmatpush.msra.mxu0 %v587
  %649 = vmatpush.msra.mxu0 %v586
  %650 = vmatpush.msra.mxu0 %v585
  %651 = vmatpush.msra.mxu0 %v584
  %652 = vmatpush.msra.mxu0 %v583
  %653 = vmatpush.msra.mxu0 %v582
  %654 = vmatpush.msra.mxu0 %v581
  %655 = vmatpush.msra.mxu0 %v580
  %656 = vmatpush.msra.mxu0 %v579
  %657 = vmatpush.msra.mxu0 %v578
  %658 = vmatpush.msra.mxu0 %v577
  %659 = vmatpush.msra.mxu0 %v576
  %660 = vmatpush.msra.mxu0 %v575
  %661 = vmatmul.f32.gmra.mxu0 %v570
  %v662 = vpop.f32.mrf.mxu0
  %v663 = vadd.f32 %v631, %v662
  %664 = vmatmul.f32.gmra.mxu0 %v571
  %v665 = vpop.f32.mrf.mxu0
  %v666 = vadd.f32 %v634, %v665
  %667 = vmatmul.f32.gmra.mxu0 %v572
  %v668 = vpop.f32.mrf.mxu0
  %v669 = vadd.f32 %v637, %v668
  %670 = vmatmul.f32.gmra.mxu0 %v573
  %v671 = vpop.f32.mrf.mxu0
  %v672 = vadd.f32 %v640, %v671
  %673 = vmatmul.f32.gmra.mxu0 %v574
  %v674 = vpop.f32.mrf.mxu0
  %v675 = vadd.f32 %v643, %v674
  %676 = vdwg.mxu0
  %v677 = vld [vmem:[#allocation3 + $0x2] sm:$0xff]
  %v678 = vld [vmem:[#allocation3 + $0xa] sm:$0xff]
  %v679 = vld [vmem:[#allocation3 + $0x12] sm:$0xff]
  %v680 = vld [vmem:[#allocation3 + $0x1a] sm:$0xff]
  %v681 = vld [vmem:[#allocation3 + $0x22] sm:$0x3]
  %s682 = scalar_lea.vmem %s2, 256
  %v683 = vld [vmem:[%s682] sm:$0xff]
  %v684 = vld [vmem:[%s682 + $0x8] sm:$0xff]
  %v685 = vld [vmem:[%s682 + $0x10] sm:$0xff]
  %v686 = vld [vmem:[%s682 + $0x18] sm:$0xff]
  %v687 = vld [vmem:[%s682 + $0x20] sm:$0xff]
  %v688 = vld [vmem:[%s682 + $0x28] sm:$0xff]
  %v689 = vld [vmem:[%s682 + $0x30] sm:$0xff]
  %v690 = vld [vmem:[%s682 + $0x38] sm:$0xff]
  %v691 = vld [vmem:[%s682 + $0x40] sm:$0xff]
  %v692 = vld [vmem:[%s682 + $0x48] sm:$0xff]
  %v693 = vld [vmem:[%s682 + $0x50] sm:$0xff]
  %v694 = vld [vmem:[%s682 + $0x58] sm:$0xff]
  %v695 = vld [vmem:[%s682 + $0x60] sm:$0xff]
  %v696 = vld [vmem:[%s682 + $0x68] sm:$0xff]
  %v697 = vld [vmem:[%s682 + $0x70] sm:$0xff]
  %v698 = vld [vmem:[%s682 + $0x78] sm:$0xff]
  %699 = vmatpush.msra.mxu0 %v698
  %700 = vmatpush.msra.mxu0 %v697
  %701 = vmatpush.msra.mxu0 %v696
  %702 = vmatpush.msra.mxu0 %v695
  %703 = vmatpush.msra.mxu0 %v694
  %704 = vmatpush.msra.mxu0 %v693
  %705 = vmatpush.msra.mxu0 %v692
  %706 = vmatpush.msra.mxu0 %v691
  %707 = vmatpush.msra.mxu0 %v690
  %708 = vmatpush.msra.mxu0 %v689
  %709 = vmatpush.msra.mxu0 %v688
  %710 = vmatpush.msra.mxu0 %v687
  %711 = vmatpush.msra.mxu0 %v686
  %712 = vmatpush.msra.mxu0 %v685
  %713 = vmatpush.msra.mxu0 %v684
  %714 = vmatpush.msra.mxu0 %v683
  %715 = vmatmul.f32.gmra.mxu0 %v677
  %v716 = vpop.f32.mrf.mxu0
  %v717 = vadd.f32 0.0, %v716
  %718 = vmatmul.f32.gmra.mxu0 %v678
  %v719 = vpop.f32.mrf.mxu0
  %v720 = vadd.f32 0.0, %v719
  %721 = vmatmul.f32.gmra.mxu0 %v679
  %v722 = vpop.f32.mrf.mxu0
  %v723 = vadd.f32 0.0, %v722
  %724 = vmatmul.f32.gmra.mxu0 %v680
  %v725 = vpop.f32.mrf.mxu0
  %v726 = vadd.f32 0.0, %v725
  %727 = vmatmul.f32.gmra.mxu0 %v681
  %v728 = vpop.f32.mrf.mxu0
  %v729 = vadd.f32 0.0, %v728
  %730 = vdwg.mxu0
  %v731 = vadd.f32 %v663, %v717
  %v732 = vadd.f32 %v666, %v720
  %v733 = vadd.f32 %v669, %v723
  %v734 = vadd.f32 %v672, %v726
  %v735 = vadd.f32 %v675, %v729
  %v736 = vmul.f32 %v731, %v230
  %v737 = vmul.f32 %v732, %v231
  %v738 = vmul.f32 %v733, %v232
  %v739 = vmul.f32 %v734, %v233
  %v740 = vmul.f32 %v735, %v234
  %v741 = vadd.f32 %v736, %v737
  %v742 = vadd.f32 %v741, %v738
  %v743 = vadd.f32 %v742, %v739
  %v744 = vsel %vm448, %v740, 0.0
  %v745 = vadd.f32 %v743, %v744
  %v746 = vrot.slane %v745, 4
  %v747 = vadd.f32 %v745, %v746
  %v748 = vrot.slane %v747, 2
  %v749 = vadd.f32 %v747, %v748
  %v750 = vrot.slane %v749, 1
  %v751 = vadd.f32 %v749, %v750
  %752 = vmatpush.msra.mxu0 %v250
  %753 = vmatpush.msra.mxu0 %v249
  %754 = vmatpush.msra.mxu0 %v248
  %755 = vmatpush.msra.mxu0 %v247
  %756 = vmatpush.msra.mxu0 %v246
  %757 = vmatpush.msra.mxu0 %v245
  %758 = vmatpush.msra.mxu0 %v244
  %759 = vmatpush.msra.mxu0 %v243
  %760 = vmatpush.msra.mxu0 %v242
  %761 = vmatpush.msra.mxu0 %v241
  %762 = vmatpush.msra.mxu0 %v240
  %763 = vmatpush.msra.mxu0 %v239
  %764 = vmatpush.msra.mxu0 %v238
  %765 = vmatpush.msra.mxu0 %v237
  %766 = vmatpush.msra.mxu0 %v236
  %767 = vmatpush.msra.mxu0 %v235
  %768 = vmatmul.f32.gmra.mxu0 %v751
  %v769 = vpop.f32.mrf.mxu0
  %v770 = vadd.f32 0.0, %v769
  %771 = vdwg.mxu0
  %v772 = vperm.slane %v770, 0
  %v773 = vsub.f32 %v731, %v772
  %v774 = vsub.f32 %v732, %v772
  %v775 = vsub.f32 %v733, %v772
  %v776 = vsub.f32 %v734, %v772
  %v777 = vsub.f32 %v735, %v772
  %v778 = vmul.f32 %v773, %v773
  %v779 = vmul.f32 %v774, %v774
  %v780 = vmul.f32 %v775, %v775
  %v781 = vmul.f32 %v776, %v776
  %v782 = vmul.f32 %v777, %v777
  %v783 = vmul.f32 %v778, %v230
  %v784 = vmul.f32 %v779, %v231
  %v785 = vmul.f32 %v780, %v232
  %v786 = vmul.f32 %v781, %v233
  %v787 = vmul.f32 %v782, %v234
  %v788 = vadd.f32 %v783, %v784
  %v789 = vadd.f32 %v788, %v785
  %v790 = vadd.f32 %v789, %v786
  %v791 = vsel %vm448, %v787, 0.0
  %v792 = vadd.f32 %v790, %v791
  %v793 = vrot.slane %v792, 4
  %v794 = vadd.f32 %v792, %v793
  %v795 = vrot.slane %v794, 2
  %v796 = vadd.f32 %v794, %v795
  %v797 = vrot.slane %v796, 1
  %v798 = vadd.f32 %v796, %v797
  %799 = vmatpush.msra.mxu0 %v250
  %800 = vmatpush.msra.mxu0 %v249
  %801 = vmatpush.msra.mxu0 %v248
  %802 = vmatpush.msra.mxu0 %v247
  %803 = vmatpush.msra.mxu0 %v246
  %804 = vmatpush.msra.mxu0 %v245
  %805 = vmatpush.msra.mxu0 %v244
  %806 = vmatpush.msra.mxu0 %v243
  %807 = vmatpush.msra.mxu0 %v242
  %808 = vmatpush.msra.mxu0 %v241
  %809 = vmatpush.msra.mxu0 %v240
  %810 = vmatpush.msra.mxu0 %v239
  %811 = vmatpush.msra.mxu0 %v238
  %812 = vmatpush.msra.mxu0 %v237
  %813 = vmatpush.msra.mxu0 %v236
  %814 = vmatpush.msra.mxu0 %v235
  %815 = vmatmul.f32.gmra.mxu0 %v798
  %v816 = vpop.f32.mrf.mxu0
  %v817 = vadd.f32 1e-05, %v816
  %818 = vdwg.mxu0
  %v819 = vrsqrt.pop %v817
  %v820 = vmul.f32 %v819, %v817
  %v821 = vmul.f32 %v820, %v819
  %v822 = vmul.f32 0.5, %v821
  %v823 = vsub.f32 1.5, %v822
  %v824 = vmul.f32 %v819, %v823
  %vm825 = vweird.f32 %v817
  %vm826 = vweird.f32 %v819
  %vm827 = vmor %vm825, %vm826
  %v828 = vsel %vm827, %v819, %v824
  %v829 = vmul.f32 %v568, %v828
  %v831 = vperm.slane %v829, 0
  %v833 = vmul.f32 %v773, %v831
  %v834 = vmul.f32 %v774, %v831
  %v835 = vmul.f32 %v775, %v831
  %v836 = vmul.f32 %v776, %v831
  %v837 = vmul.f32 %v777, %v831
  %v839 = vperm.slane %v569, 0
  %v841 = vadd.f32 %v833, %v839
  %v842 = vadd.f32 %v834, %v839
  %v843 = vadd.f32 %v835, %v839
  %v844 = vadd.f32 %v836, %v839
  %v845 = vadd.f32 %v837, %v839
  %v846 = vmax.f32 %v841, 0.0
  %v847 = vmax.f32 %v842, 0.0
  %v848 = vmax.f32 %v843, 0.0
  %v849 = vmax.f32 %v844, 0.0
  %v850 = vmax.f32 %v845, 0.0
  %851 = vst [vmem:[%s8] sm:$0xff] %v846
  %852 = vst [vmem:[%s8 + $0x8] sm:$0xff] %v847
  %853 = vst [vmem:[%s8 + $0xe] sm:$0xfc] %v848
  %854 = vst [vmem:[%s8 + $0x16] sm:$0xff] %v849
  %855 = vst [vmem:[%s8 + $0x1e] sm:$0x3] %v850
  // Predicated region
  $region34: #{conv_block_forward.1} parent=0 // pred_check
    _
  $region35: #{conv_block_forward.1} parent=0 // pred_check_branch
    %857 = sbr.rel (0) target = $region37
  $region36: #{conv_block_forward.1} parent=0 // pred_region
    _
  $region37: #{conv_block_forward.1} parent=0 // pred_fallthru
    _
  // Predicated region
  $region38: #{conv_block_forward.1} parent=0 // pred_check
    _
  $region39: #{conv_block_forward.1} parent=0 // pred_check_branch
    %859 = sbr.rel (0) target = $region41
  $region40: #{conv_block_forward.1} parent=0 // pred_region
    _
  $region41: #{conv_block_forward.1} parent=0 // pred_fallthru
    _

</llo_original>
